<compile_context>
chip_gen: v7x
topology: tpu7x:2x2x1
jax: 0.10.0
libtpu: 0.0.40
codegen_flags: <defaults>
</compile_context>

<pallas_src>
import math

import numpy as np
import jax
import jax.numpy as jnp
from jax.experimental import pallas as pl
from jax.experimental.pallas import tpu as pltpu


_LANES = 128          # lane width of the flattened layout (full vreg stores)
_MAX_TILE_ROWS = 1024  # sublane rows per grid step; 9*1024*128*4B ~ 4.5 MiB/input block


def _binomial_coeffs(filt_size: int) -> np.ndarray:
    table = {
        1: [1.0],
        2: [1.0, 1.0],
        3: [1.0, 2.0, 1.0],
        4: [1.0, 3.0, 3.0, 1.0],
        5: [1.0, 4.0, 6.0, 4.0, 1.0],
        6: [1.0, 5.0, 10.0, 10.0, 5.0, 1.0],
        7: [1.0, 6.0, 15.0, 20.0, 15.0, 6.0, 1.0],
    }
    return np.asarray(table[filt_size], dtype=np.float64)


def get_filter_2d(filt_size: int) -> np.ndarray:
    """Same binomial blur filter as the PyTorch `get_filter`, normalized."""
    a = _binomial_coeffs(filt_size)
    f = a[:, None] * a[None, :]
    return (f / f.sum()).astype(np.float32)


def _round_up(x: int, m: int) -> int:
    return ((x + m - 1) // m) * m


def _make_blurpool_kernel(filt_vals):
    """Kernel: weighted sum over the K*K polyphase taps (depthwise-conv MAC),
    fully unrolled over the static tap count. Filter weights are baked in as
    compile-time constants."""
    num_taps = len(filt_vals)

    def kernel(x_ref, o_ref):
        # x_ref: VMEM (num_taps, TILE_ROWS, 128); o_ref: VMEM (TILE_ROWS, 128)
        acc = filt_vals[0] * x_ref[0].astype(jnp.float32)
        for k in range(1, num_taps):
            acc = acc + filt_vals[k] * x_ref[k].astype(jnp.float32)
        o_ref[...] = acc.astype(o_ref.dtype)

    return kernel


def downsample(x: jnp.ndarray, filt_size: int = 3, stride: int = 2,
               pad_off: int = 0, stream_dtype=None) -> jnp.ndarray:
    """Forward of Downsample(channels=C, pad_type='reflect', filt_size, stride, pad_off).

    x: (N, C, H, W) float32, NCHW. Returns (N, C, Ho, Wo).
    stream_dtype: optional narrower dtype (e.g. jnp.bfloat16) for the streamed
    taps; accumulation stays f32 and the output keeps x.dtype.
    """
    N, C, H, W = x.shape
    p0 = int(1.0 * (filt_size - 1) / 2) + pad_off
    p1 = int(math.ceil(1.0 * (filt_size - 1) / 2)) + pad_off

    if filt_size == 1:
        # Pure subsampling path (no conv); matches the PyTorch branch.
        if pad_off != 0:
            x = jnp.pad(x, ((0, 0), (0, 0), (p0, p1), (p0, p1)), mode="reflect")
        return x[:, :, ::stride, ::stride]

    # Reflection pad (glue).
    xpad = jnp.pad(x, ((0, 0), (0, 0), (p0, p1), (p0, p1)), mode="reflect")
    Hp, Wp = H + p0 + p1, W + p0 + p1
    Ho = (Hp - filt_size) // stride + 1
    Wo = (Wp - filt_size) // stride + 1
    num_taps = filt_size * filt_size
    M = N * C * Ho * Wo

    # Polyphase decomposition (glue): K*K strided shifted views, flattened.
    # TODO(synk): the taps are still materialized in HBM by XLA; forming them
    # in-kernel from xpad needs overlapping (halo) blocks / lane-strided reads
    # (manual DMA), left as glue for now.
    shifts = []
    for u in range(filt_size):
        for v in range(filt_size):
            shifts.append(
                xpad[:, :,
                     u:u + stride * (Ho - 1) + 1:stride,
                     v:v + stride * (Wo - 1) + 1:stride].reshape(-1)
            )
    xs = jnp.stack(shifts, axis=0)  # (num_taps, M)

    # Lane-dense flattening: (num_taps, rows, 128), rows a multiple of tile_rows.
    rows_needed = (M + _LANES - 1) // _LANES
    tile_rows = min(_MAX_TILE_ROWS, _round_up(rows_needed, 8))
    m_pad = _round_up(M, tile_rows * _LANES)
    if m_pad != M:
        xs = jnp.pad(xs, ((0, 0), (0, m_pad - M)))
    rows = m_pad // _LANES
    xs3 = xs.reshape(num_taps, rows, _LANES)
    if stream_dtype is not None:
        xs3 = xs3.astype(stream_dtype)

    filt_vals = tuple(float(v) for v in get_filter_2d(filt_size).reshape(-1))
    kernel = _make_blurpool_kernel(filt_vals)

    grid = (rows // tile_rows,)
    out = pl.pallas_call(
        kernel,
        out_shape=jax.ShapeDtypeStruct((rows, _LANES), x.dtype),
        grid_spec=pltpu.PrefetchScalarGridSpec(
            num_scalar_prefetch=0,
            grid=grid,
            in_specs=[
                pl.BlockSpec((num_taps, tile_rows, _LANES),
                             lambda i: (0, i, 0)),
            ],
            out_specs=pl.BlockSpec((tile_rows, _LANES), lambda i: (i, 0)),
        ),
        compiler_params=pltpu.CompilerParams(
            dimension_semantics=("parallel",),
            vmem_limit_bytes=32 * 1024 * 1024,
        ),
    )(xs3)

    return out.reshape(-1)[:M].reshape(N, C, Ho, Wo)


def _reference_downsample(x, filt_size=3, stride=2, pad_off=0):
    """Pure-JAX reference mirroring F.conv2d(pad(x), filt, stride, groups=C)."""
    N, C, H, W = x.shape
    p0 = int(1.0 * (filt_size - 1) / 2) + pad_off
    p1 = int(math.ceil(1.0 * (filt_size - 1) / 2)) + pad_off
    if filt_size == 1:
        if pad_off != 0:
            x = jnp.pad(x, ((0, 0), (0, 0), (p0, p1), (p0, p1)), mode="reflect")
        return x[:, :, ::stride, ::stride]
    xpad = jnp.pad(x, ((0, 0), (0, 0), (p0, p1), (p0, p1)), mode="reflect")
    f2d = jnp.asarray(get_filter_2d(filt_size))
    w = jnp.broadcast_to(f2d[None, None], (C, 1, filt_size, filt_size))
    return jax.lax.conv_general_dilated(
        xpad, w, window_strides=(stride, stride), padding="VALID",
        dimension_numbers=("NCHW", "OIHW", "NCHW"), feature_group_count=C)


if __name__ == "__main__":
    key = jax.random.PRNGKey(0)

    configs = [
        # (shape, filt_size, stride, pad_off)
        ((2, 4, 16, 16), 3, 2, 0),   # the standard blur-pool case
        ((1, 3, 17, 13), 4, 2, 0),   # asymmetric pad, ragged sizes (exercises padding path)
        ((2, 4, 16, 16), 5, 2, 1),   # larger filter + pad_off
        ((2, 4, 16, 16), 1, 2, 0),   # filt_size==1 pure-subsample branch
    ]

    for i, (shape, fs, st, po) in enumerate(configs):
        k = jax.random.fold_in(key, i)
        x = jax.random.normal(k, shape, dtype=jnp.float32)
        out = jax.block_until_ready(downsample(x, filt_size=fs, stride=st, pad_off=po))
        ref = jax.block_until_ready(_reference_downsample(x, fs, st, po))
        assert out.shape == ref.shape, (out.shape, ref.shape)
        assert jnp.allclose(out, ref, atol=1e-5, rtol=1e-5), \
            f"mismatch vs reference for config {(shape, fs, st, po)}"

    print("KERNEL_OK")
</pallas_src>

<mosaic_0001>
module attributes {stable_mosaic.version = 11 : i64} {
  func.func @kernel(%arg0: i32, %arg1: memref<9x8x128xf32, #tpu.memory_space<vmem>>, %arg2: memref<8x128xf32, #tpu.memory_space<vmem>>) attributes {dimension_semantics = [#tpu.dimension_semantics<parallel>], iteration_bounds = array<i64: 1>, scalar_prefetch = 0 : i64, scratch_operands = 0 : i64, tpu.core_type = #tpu.core_type<tc>, window_params = [{transform_indices = @transform_0, window_bounds = array<i64: 9, 8, 128>}, {transform_indices = @transform_1, window_bounds = array<i64: 8, 128>}]} {
    %c0 = arith.constant 0 : index
    %c0_0 = arith.constant 0 : index
    %c0_1 = arith.constant 0 : index
    %0 = vector.load %arg1[%c0, %c0_0, %c0_1] : memref<9x8x128xf32, #tpu.memory_space<vmem>>, vector<1x8x128xf32>
    %1 = vector.shape_cast %0 : vector<1x8x128xf32> to vector<8x128xf32>
    %cst = arith.constant 6.250000e-02 : f32
    %2 = vector.broadcast %cst : f32 to vector<8x128xf32>
    %3 = arith.mulf %2, %1 : vector<8x128xf32>
    %c1 = arith.constant 1 : index
    %c0_2 = arith.constant 0 : index
    %c0_3 = arith.constant 0 : index
    %4 = vector.load %arg1[%c1, %c0_2, %c0_3] : memref<9x8x128xf32, #tpu.memory_space<vmem>>, vector<1x8x128xf32>
    %5 = vector.shape_cast %4 : vector<1x8x128xf32> to vector<8x128xf32>
    %cst_4 = arith.constant 1.250000e-01 : f32
    %6 = vector.broadcast %cst_4 : f32 to vector<8x128xf32>
    %7 = arith.mulf %6, %5 : vector<8x128xf32>
    %8 = arith.addf %3, %7 : vector<8x128xf32>
    %c2 = arith.constant 2 : index
    %c0_5 = arith.constant 0 : index
    %c0_6 = arith.constant 0 : index
    %9 = vector.load %arg1[%c2, %c0_5, %c0_6] : memref<9x8x128xf32, #tpu.memory_space<vmem>>, vector<1x8x128xf32>
    %10 = vector.shape_cast %9 : vector<1x8x128xf32> to vector<8x128xf32>
    %cst_7 = arith.constant 6.250000e-02 : f32
    %11 = vector.broadcast %cst_7 : f32 to vector<8x128xf32>
    %12 = arith.mulf %11, %10 : vector<8x128xf32>
    %13 = arith.addf %8, %12 : vector<8x128xf32>
    %c3 = arith.constant 3 : index
    %c0_8 = arith.constant 0 : index
    %c0_9 = arith.constant 0 : index
    %14 = vector.load %arg1[%c3, %c0_8, %c0_9] : memref<9x8x128xf32, #tpu.memory_space<vmem>>, vector<1x8x128xf32>
    %15 = vector.shape_cast %14 : vector<1x8x128xf32> to vector<8x128xf32>
    %cst_10 = arith.constant 1.250000e-01 : f32
    %16 = vector.broadcast %cst_10 : f32 to vector<8x128xf32>
    %17 = arith.mulf %16, %15 : vector<8x128xf32>
    %18 = arith.addf %13, %17 : vector<8x128xf32>
    %c4 = arith.constant 4 : index
    %c0_11 = arith.constant 0 : index
    %c0_12 = arith.constant 0 : index
    %19 = vector.load %arg1[%c4, %c0_11, %c0_12] : memref<9x8x128xf32, #tpu.memory_space<vmem>>, vector<1x8x128xf32>
    %20 = vector.shape_cast %19 : vector<1x8x128xf32> to vector<8x128xf32>
    %cst_13 = arith.constant 2.500000e-01 : f32
    %21 = vector.broadcast %cst_13 : f32 to vector<8x128xf32>
    %22 = arith.mulf %21, %20 : vector<8x128xf32>
    %23 = arith.addf %18, %22 : vector<8x128xf32>
    %c5 = arith.constant 5 : index
    %c0_14 = arith.constant 0 : index
    %c0_15 = arith.constant 0 : index
    %24 = vector.load %arg1[%c5, %c0_14, %c0_15] : memref<9x8x128xf32, #tpu.memory_space<vmem>>, vector<1x8x128xf32>
    %25 = vector.shape_cast %24 : vector<1x8x128xf32> to vector<8x128xf32>
    %cst_16 = arith.constant 1.250000e-01 : f32
    %26 = vector.broadcast %cst_16 : f32 to vector<8x128xf32>
    %27 = arith.mulf %26, %25 : vector<8x128xf32>
    %28 = arith.addf %23, %27 : vector<8x128xf32>
    %c6 = arith.constant 6 : index
    %c0_17 = arith.constant 0 : index
    %c0_18 = arith.constant 0 : index
    %29 = vector.load %arg1[%c6, %c0_17, %c0_18] : memref<9x8x128xf32, #tpu.memory_space<vmem>>, vector<1x8x128xf32>
    %30 = vector.shape_cast %29 : vector<1x8x128xf32> to vector<8x128xf32>
    %cst_19 = arith.constant 6.250000e-02 : f32
    %31 = vector.broadcast %cst_19 : f32 to vector<8x128xf32>
    %32 = arith.mulf %31, %30 : vector<8x128xf32>
    %33 = arith.addf %28, %32 : vector<8x128xf32>
    %c7 = arith.constant 7 : index
    %c0_20 = arith.constant 0 : index
    %c0_21 = arith.constant 0 : index
    %34 = vector.load %arg1[%c7, %c0_20, %c0_21] : memref<9x8x128xf32, #tpu.memory_space<vmem>>, vector<1x8x128xf32>
    %35 = vector.shape_cast %34 : vector<1x8x128xf32> to vector<8x128xf32>
    %cst_22 = arith.constant 1.250000e-01 : f32
    %36 = vector.broadcast %cst_22 : f32 to vector<8x128xf32>
    %37 = arith.mulf %36, %35 : vector<8x128xf32>
    %38 = arith.addf %33, %37 : vector<8x128xf32>
    %c8 = arith.constant 8 : index
    %c0_23 = arith.constant 0 : index
    %c0_24 = arith.constant 0 : index
    %39 = vector.load %arg1[%c8, %c0_23, %c0_24] : memref<9x8x128xf32, #tpu.memory_space<vmem>>, vector<1x8x128xf32>
    %40 = vector.shape_cast %39 : vector<1x8x128xf32> to vector<8x128xf32>
    %cst_25 = arith.constant 6.250000e-02 : f32
    %41 = vector.broadcast %cst_25 : f32 to vector<8x128xf32>
    %42 = arith.mulf %41, %40 : vector<8x128xf32>
    %43 = arith.addf %38, %42 : vector<8x128xf32>
    %c0_26 = arith.constant 0 : index
    %c0_27 = arith.constant 0 : index
    %44 = vector.load %arg2[%c0_26, %c0_27] : memref<8x128xf32, #tpu.memory_space<vmem>>, vector<8x128xf32>
    tpu.vector_store %arg2[%c0_26, %c0_27], %43 {strides = array<i32>} : memref<8x128xf32, #tpu.memory_space<vmem>>, vector<8x128xf32>,
    return
  }
  func.func @transform_0(%arg0: i32) -> (i32, i32, i32) {
    %c0_i32 = arith.constant 0 : i32
    %c0_i32_0 = arith.constant 0 : i32
    %c0_i32_1 = arith.constant 0 : i32
    return %c0_i32, %arg0, %c0_i32_0 : i32, i32, i32
  }
  func.func @transform_1(%arg0: i32) -> (i32, i32) {
    %c0_i32 = arith.constant 0 : i32
    %c0_i32_0 = arith.constant 0 : i32
    return %arg0, %c0_i32 : i32, i32
  }
}

</mosaic_0001>

<llo_original>
// kernel: tpu_custom_call.1
$region0: #{tpu_custom_call.1}
  #allocation0 [shape = 'u32[]', space=smem, size = 0x4, offset = 0x4, fixed_abs, tag = 'smem constant byte address 0x4 - core index']
  #allocation1 [shape = 'u32[144,128]{1,0:T(1,128)}', space=vmem, size = 0x12000, scoped, tag = 'internal scratch']
  %s0 = inlined_call_operand.hbm [shape: f32[9,8,128], index: 0, kind: input, shape index: {}]
  %s1 = inlined_call_operand.hbm [shape: f32[8,128], index: 1, kind: output, shape index: {}]
  %s2 = sld [smem:[#allocation0]]
  $region18: #{tpu_custom_call.1} parent=0
    _
  %s4 = ssub.s32 1, %s2
  %s5 = scalar_select 0, %s4, %s2
  $region1: #{tpu_custom_call.1} parent=0
    #allocation2 [shape = 'u8[36864]{0}', space=vmem, size = 0x9000, scoped, tag = 'input window, operand 0, single buffered']
    #allocation3 [shape = 's32[1]{0}', space=sflag, size = 0x4, scoped, tag = 'scoped memory for tpu_custom_call.1']
    #allocation4 [shape = 's32[1]{0}', space=sflag, size = 0x4, scoped, tag = 'scoped memory for tpu_custom_call.1']
    #allocation5 [shape = 'u8[4096]{0}', space=vmem, size = 0x1000, scoped, tag = 'output window, operand 0, single buffered']
    %6 = vsyncpa [#allocation3], 0
    %7 = vsyncpa [#allocation4], 0
    // Predicated region
    $region2: #{tpu_custom_call.1} parent=1 // pred_check
      _
    $region3: #{tpu_custom_call.1} parent=1 // pred_check_branch
      %9 = sbr.rel (0) target = $region5
    $region4: #{tpu_custom_call.1} parent=1 // pred_region
      %s11 = ssub.s32 1152, 1152
      %12 = vsyncadd [#allocation3], %s11
      %s13 = sshll.u32 [#allocation2], 4
      %s14 = int_to_ptr.vmem [resolvable:$true] %s13
      %19 = dma.hbm_to_vmem [thread:$0]  %s0, 1152, %s14, [#allocation3], 128, 128, 8
    $region5: #{tpu_custom_call.1} parent=1 // pred_fallthru
      _
    // Predicated region
    $region6: #{tpu_custom_call.1} parent=1 // pred_check
      _
    $region7: #{tpu_custom_call.1} parent=1 // pred_check_branch
      %21 = sbr.rel (0) target = $region9
    $region8: #{tpu_custom_call.1} parent=1 // pred_region
      %22 = dma.done [#allocation3], 1152
    $region9: #{tpu_custom_call.1} parent=1 // pred_fallthru
      _
    %v23 = vld [vmem:[#allocation2] sm:$0xff]
    %v24 = vmul.f32 %v23, 0.0625
    %s25 = scalar_lea.vmem [#allocation2], 8
    %v26 = vld [vmem:[%s25] sm:$0xff]
    %v27 = vmul.f32 %v26, 0.125
    %v28 = vadd.f32 %v24, %v27
    %s29 = scalar_lea.vmem [#allocation2], 16
    %v30 = vld [vmem:[%s29] sm:$0xff]
    %v31 = vmul.f32 %v30, 0.0625
    %v32 = vadd.f32 %v28, %v31
    %s33 = scalar_lea.vmem [#allocation2], 24
    %v34 = vld [vmem:[%s33] sm:$0xff]
    %v35 = vmul.f32 %v34, 0.125
    %v36 = vadd.f32 %v32, %v35
    %s37 = scalar_lea.vmem [#allocation2], 32
    %v38 = vld [vmem:[%s37] sm:$0xff]
    %v39 = vmul.f32 %v38, 0.25
    %v40 = vadd.f32 %v36, %v39
    %s41 = scalar_lea.vmem [#allocation2], 40
    %v42 = vld [vmem:[%s41] sm:$0xff]
    %v43 = vmul.f32 %v42, 0.125
    %v44 = vadd.f32 %v40, %v43
    %s45 = scalar_lea.vmem [#allocation2], 48
    %v46 = vld [vmem:[%s45] sm:$0xff]
    %v47 = vmul.f32 %v46, 0.0625
    %v48 = vadd.f32 %v44, %v47
    %s49 = scalar_lea.vmem [#allocation2], 56
    %v50 = vld [vmem:[%s49] sm:$0xff]
    %v51 = vmul.f32 %v50, 0.125
    %v52 = vadd.f32 %v48, %v51
    %s53 = scalar_lea.vmem [#allocation2], 64
    %v54 = vld [vmem:[%s53] sm:$0xff]
    %v55 = vmul.f32 %v54, 0.0625
    %v56 = vadd.f32 %v52, %v55
    %57 = vst [vmem:[#allocation5] sm:$0xff] %v56
    // Predicated region
    $region10: #{tpu_custom_call.1} parent=1 // pred_check
      _
    $region11: #{tpu_custom_call.1} parent=1 // pred_check_branch
      %59 = sbr.rel (0) target = $region13
    $region12: #{tpu_custom_call.1} parent=1 // pred_region
      %s61 = ssub.s32 128, 128
      %62 = vsyncadd [#allocation4], %s61
      %s64 = sshll.u32 [#allocation5], 4
      %s65 = int_to_ptr.vmem [resolvable:$true] %s64
      %67 = dma.vmem_to_hbm [thread:$0]  %s65, 128, %s1, [#allocation4]
    $region13: #{tpu_custom_call.1} parent=1 // pred_fallthru
      _
    // Predicated region
    $region14: #{tpu_custom_call.1} parent=1 // pred_check
      _
    $region15: #{tpu_custom_call.1} parent=1 // pred_check_branch
      %69 = sbr.rel (0) target = $region17
    $region16: #{tpu_custom_call.1} parent=1 // pred_region
      %70 = dma.done [#allocation4], 128
    $region17: #{tpu_custom_call.1} parent=1 // pred_fallthru
      _
    %71 = vsyncpa [#allocation3], 1
    %72 = vsyncpa [#allocation4], 1

</llo_original>
